<compile_context>
chip_gen: v7x
topology: tpu7x:2x2x1
jax: 0.10.0
libtpu: 0.0.40
codegen_flags: <defaults>
</compile_context>

<pallas_src>
import functools

import jax
import jax.numpy as jnp
from jax.experimental import pallas as pl
from jax.experimental.pallas import tpu as pltpu


_LANE = 128     # lane/feature padding granule (use 256 at scale on v6e/v7x)
_SUBLANE = 8    # pad step-row counts to the sublane width


def _round_up(x, m):
    return (x + m - 1) // m * m


# ----------------------------------------------------------------------------
# Fused kernel: adjacency normalization + all GCN layers + gather + BPR loss.
# Runs as one gridless pallas_call; everything fits in VMEM at these sizes.
# ----------------------------------------------------------------------------
def _lmgnn_fused_kernel(adj_ref, x_ref, step_ref, pos_ref, neg_ref,
                        w_ref, b_ref, loss_ref, *,
                        layer_dims, n_tools, n_steps):
    n = adj_ref.shape[0]

    # --- symmetric GCN normalization  D^-1/2 (A + I) D^-1/2 -------------------
    # Raw adjacency arrives as bf16 (binary -> exact); do the math in f32.
    # Degrees are computed directly as sum(adj)+1 (self-loop) instead of
    # materializing A+I, and the diagonal contribution is added with a single
    # masked dscale term — only one f32 (n,n) temp lives alongside adj_bf.
    adj = adj_ref[...].astype(jnp.float32)
    deg_r = jnp.sum(adj, axis=1, keepdims=True) + 1.0           # (n, 1)
    deg_c = jnp.sum(adj, axis=0, keepdims=True) + 1.0           # (1, n)
    dscale = jax.lax.rsqrt(deg_r) * jax.lax.rsqrt(deg_c)        # (n, n) bcast
    diag = (jax.lax.broadcasted_iota(jnp.int32, (n, n), 0) ==
            jax.lax.broadcasted_iota(jnp.int32, (n, n), 1))
    adj_bf = (adj * dscale + jnp.where(diag, dscale, 0.0)).astype(jnp.bfloat16)

    # --- GNN propagation: statically unrolled layer loop ----------------------
    h = x_ref[...]                                              # f32 (n, DP)
    n_layers = len(layer_dims) - 1
    for l in range(n_layers):
        din, dout = layer_dims[l], layer_dims[l + 1]
        w = w_ref[l]                                            # bf16 (DP, DP)
        b = b_ref[l]                                            # f32  (1, DP)
        h_bf = h.astype(jnp.bfloat16)
        if dout <= din:
            # cheaper association: A_hat @ (X @ W)
            xw = jnp.dot(h_bf, w, preferred_element_type=jnp.float32)
            y = jnp.dot(adj_bf, xw.astype(jnp.bfloat16),
                        preferred_element_type=jnp.float32)
        else:
            # cheaper association: (A_hat @ X) @ W
            ah = jnp.dot(adj_bf, h_bf, preferred_element_type=jnp.float32)
            y = jnp.dot(ah.astype(jnp.bfloat16), w,
                        preferred_element_type=jnp.float32)
        y = y + b
        if l < n_layers - 1:
            y = jnp.maximum(y, 0.0)                             # ReLU between layers
        h = y

    # --- gather + BPR score difference: ONE bf16 selection matmul -------------
    # sel = onehot(neg) - onehot(pos) takes values in {-1, 0, +1}, exact in
    # bf16, so (neg_emb - pos_emb) comes out of a single MXU pass.
    s_pad = step_ref.shape[0]
    lane = jax.lax.broadcasted_iota(jnp.int32, (s_pad, n), 1)
    pos = pos_ref[...]                                          # (s_pad, 1)
    neg = neg_ref[...]
    pos_ok = jnp.logical_and(pos >= 0, pos < n_tools)           # mask bad idx
    neg_ok = jnp.logical_and(neg >= 0, neg < n_tools)
    sel_pos = jnp.logical_and(lane == pos, pos_ok)
    sel_neg = jnp.logical_and(lane == neg, neg_ok)
    sel = (sel_neg.astype(jnp.float32)
           - sel_pos.astype(jnp.float32)).astype(jnp.bfloat16)  # (s_pad, n)
    diff_emb = jnp.dot(sel, h.astype(jnp.bfloat16),
                       preferred_element_type=jnp.float32)      # (s_pad, DP)
    diff = jnp.sum(step_ref[...] * diff_emb, axis=-1,
                   keepdims=True)                               # neg_s - pos_s

    # --- BPR loss: numerically stable softplus, masked mean over real rows ----
    sp = jnp.maximum(diff, 0.0) + jnp.log1p(jnp.exp(-jnp.abs(diff)))
    srow = jax.lax.broadcasted_iota(jnp.int32, (s_pad, 1), 0)
    mask = (srow < n_steps).astype(jnp.float32)
    loss_ref[0, 0] = jnp.sum(sp * mask) * (1.0 / n_steps)       # SMEM scalar


# ----------------------------------------------------------------------------
# One-time prep (hoisted out of the per-step hot path).
# ----------------------------------------------------------------------------
def prepare_gnn_params(weights, biases, in_dim):
    """Pad + stack GNN parameters once (they are static across steps)."""
    layer_dims = tuple([int(in_dim)] + [int(w.shape[1]) for w in weights])
    dp = _round_up(max(layer_dims), _LANE)
    n_layers = len(weights)
    w_stack = jnp.zeros((n_layers, dp, dp), jnp.bfloat16)
    b_stack = jnp.zeros((n_layers, 1, dp), jnp.float32)
    for l, (w, b) in enumerate(zip(weights, biases)):
        w_stack = w_stack.at[l, :w.shape[0], :w.shape[1]].set(w.astype(jnp.bfloat16))
        b_stack = b_stack.at[l, 0, :b.shape[-1]].set(
            b.reshape(-1).astype(jnp.float32))
    return w_stack, b_stack, layer_dims, dp


def prepare_adjacency(tool_adj, n_pad=None):
    """Pad the (static, binary) adjacency once; bf16 is exact for 0/1."""
    n = tool_adj.shape[0]
    if n_pad is None:
        n_pad = _round_up(n, _LANE)
    adj_p = jnp.zeros((n_pad, n_pad), jnp.bfloat16)
    return adj_p.at[:n, :n].set(tool_adj.astype(jnp.bfloat16))


def pad_step_inputs(tool_emb, step_emb, pos_tools, neg_tools, n_pad, s_pad, dp):
    """Pad the per-step dynamic inputs (LM CLS embeddings + indices)."""
    n, d = tool_emb.shape
    s = step_emb.shape[0]
    x_p = jnp.zeros((n_pad, dp), jnp.float32).at[:n, :d].set(
        tool_emb.astype(jnp.float32))
    step_p = jnp.zeros((s_pad, dp), jnp.float32).at[:s, :d].set(
        step_emb.astype(jnp.float32))
    pos_p = jnp.zeros((s_pad, 1), jnp.int32).at[:s, 0].set(
        pos_tools.astype(jnp.int32))
    neg_p = jnp.zeros((s_pad, 1), jnp.int32).at[:s, 0].set(
        neg_tools.astype(jnp.int32))
    return x_p, step_p, pos_p, neg_p


# ----------------------------------------------------------------------------
# Hot-path wrapper: operands are already padded; this is just the pallas_call.
# ----------------------------------------------------------------------------
def lmgnn_forward_padded(adj_p, x_p, step_p, pos_p, neg_p, w_stack, b_stack,
                         *, layer_dims, n_tools, n_steps):
    kernel = functools.partial(_lmgnn_fused_kernel,
                               layer_dims=tuple(int(d) for d in layer_dims),
                               n_tools=int(n_tools), n_steps=int(n_steps))
    out = pl.pallas_call(
        kernel,
        out_shape=jax.ShapeDtypeStruct((1, 1), jnp.float32),
        in_specs=[pl.BlockSpec(memory_space=pltpu.MemorySpace.VMEM)] * 7,
        out_specs=pl.BlockSpec(memory_space=pltpu.MemorySpace.SMEM),
        compiler_params=pltpu.CompilerParams(
            vmem_limit_bytes=32 * 1024 * 1024),
    )(adj_p, x_p, step_p, pos_p, neg_p, w_stack, b_stack)
    return out[0, 0]


def lmgnn_forward(tool_emb, step_emb, tool_adj, pos_tools, neg_tools,
                  weights, biases):
    """Convenience one-shot wrapper (prep + call). Training loops should call
    the prep helpers once and jit lmgnn_forward_padded directly."""
    n = tool_adj.shape[0]
    s, d = step_emb.shape
    w_stack, b_stack, layer_dims, dp = prepare_gnn_params(weights, biases, d)
    n_pad = _round_up(n, _LANE)
    s_pad = _round_up(s, _SUBLANE)
    adj_p = prepare_adjacency(tool_adj, n_pad)
    x_p, step_p, pos_p, neg_p = pad_step_inputs(
        tool_emb, step_emb, pos_tools, neg_tools, n_pad, s_pad, dp)
    return lmgnn_forward_padded(adj_p, x_p, step_p, pos_p, neg_p,
                                w_stack, b_stack,
                                layer_dims=layer_dims, n_tools=n, n_steps=s)


# ----------------------------------------------------------------------------
# Pure-JAX references.
# ----------------------------------------------------------------------------
def _norm_adj_f32(tool_adj):
    a = tool_adj.astype(jnp.float32)
    deg_r = jnp.sum(a, axis=1, keepdims=True) + 1.0
    deg_c = jnp.sum(a, axis=0, keepdims=True) + 1.0
    dscale = jax.lax.rsqrt(deg_r) * jax.lax.rsqrt(deg_c)
    n = a.shape[0]
    return a * dscale + jnp.eye(n, dtype=jnp.float32) * dscale


def _reference_matched(tool_emb, step_emb, tool_adj, pos_tools, neg_tools,
                       weights, biases):
    """Mirrors the kernel math exactly (bf16 operands, f32 accumulate,
    bf16 selection matmul for the gather)."""
    n = tool_adj.shape[0]
    adj_bf = _norm_adj_f32(tool_adj.astype(jnp.bfloat16)).astype(jnp.bfloat16)
    h = tool_emb.astype(jnp.float32)
    nl = len(weights)
    for l, (w, b) in enumerate(zip(weights, biases)):
        din, dout = w.shape
        w_bf = w.astype(jnp.bfloat16)
        h_bf = h.astype(jnp.bfloat16)
        if dout <= din:
            xw = jnp.dot(h_bf, w_bf, preferred_element_type=jnp.float32)
            y = jnp.dot(adj_bf, xw.astype(jnp.bfloat16),
                        preferred_element_type=jnp.float32)
        else:
            ah = jnp.dot(adj_bf, h_bf, preferred_element_type=jnp.float32)
            y = jnp.dot(ah.astype(jnp.bfloat16), w_bf,
                        preferred_element_type=jnp.float32)
        y = y + b.astype(jnp.float32)
        if l < nl - 1:
            y = jnp.maximum(y, 0.0)
        h = y
    lanes = jnp.arange(n, dtype=jnp.int32)[None, :]
    onehot_pos = (lanes == pos_tools[:, None]).astype(jnp.float32)
    onehot_neg = (lanes == neg_tools[:, None]).astype(jnp.float32)
    sel = (onehot_neg - onehot_pos).astype(jnp.bfloat16)
    diff_emb = jnp.dot(sel, h.astype(jnp.bfloat16),
                       preferred_element_type=jnp.float32)
    diff = jnp.sum(step_emb.astype(jnp.float32) * diff_emb, axis=-1)
    sp = jnp.maximum(diff, 0.0) + jnp.log1p(jnp.exp(-jnp.abs(diff)))
    return jnp.mean(sp)


def _reference_f32(tool_emb, step_emb, tool_adj, pos_tools, neg_tools,
                   weights, biases):
    """Full-precision semantic reference (mirrors the torch module)."""
    adj_norm = _norm_adj_f32(tool_adj)
    h = tool_emb.astype(jnp.float32)
    for l, (w, b) in enumerate(zip(weights, biases)):
        h = (adj_norm @ h) @ w + b
        if l < len(weights) - 1:
            h = jnp.maximum(h, 0.0)
    pos = h[pos_tools, :]
    neg = h[neg_tools, :]
    ps = jnp.sum(step_emb * pos, axis=-1)
    ns = jnp.sum(step_emb * neg, axis=-1)
    df = ns - ps
    return jnp.mean(jnp.maximum(df, 0.0) + jnp.log1p(jnp.exp(-jnp.abs(df))))


if __name__ == "__main__":
    # Small shapes consistent with the module:
    #   N_TOOLS tool nodes, N_STEPS plan steps, emb_dim D, gnn_hidden_dim H.
    N_TOOLS, N_STEPS, D, H, N_LAYERS = 16, 8, 32, 32, 2

    key = jax.random.PRNGKey(0)
    k_tool, k_step, k_adj, k_pos, k_neg, k_w = jax.random.split(key, 6)

    # Stand-ins for lm_forward() CLS embeddings.
    tool_emb = jax.random.normal(k_tool, (N_TOOLS, D), dtype=jnp.float32)
    step_emb = jax.random.normal(k_step, (N_STEPS, D), dtype=jnp.float32)

    # Random symmetric binary adjacency over tools.
    a = (jax.random.uniform(k_adj, (N_TOOLS, N_TOOLS)) > 0.7).astype(jnp.float32)
    tool_adj = jnp.maximum(a, a.T)

    pos_tools = jax.random.randint(k_pos, (N_STEPS,), 0, N_TOOLS, dtype=jnp.int32)
    neg_tools = jax.random.randint(k_neg, (N_STEPS,), 0, N_TOOLS, dtype=jnp.int32)

    # GNN parameters: emb_dim -> hidden -> ... -> emb_dim.
    dims = [D] + [H] * (N_LAYERS - 1) + [D]
    weights, biases = [], []
    wkeys = jax.random.split(k_w, N_LAYERS)
    for li in range(N_LAYERS):
        fan_in, fan_out = dims[li], dims[li + 1]
        scale = 1.0 / jnp.sqrt(jnp.float32(fan_in))
        weights.append(scale * jax.random.normal(wkeys[li], (fan_in, fan_out),
                                                 dtype=jnp.float32))
        biases.append(jnp.zeros((1, fan_out), dtype=jnp.float32))

    # One-time prep (hoisted out of the hot path).
    w_stack, b_stack, layer_dims, dp = prepare_gnn_params(weights, biases, D)
    n_pad = _round_up(N_TOOLS, _LANE)
    s_pad = _round_up(N_STEPS, _SUBLANE)
    adj_p = prepare_adjacency(tool_adj, n_pad)
    x_p, step_p, pos_p, neg_p = pad_step_inputs(
        tool_emb, step_emb, pos_tools, neg_tools, n_pad, s_pad, dp)

    # Hot path: just the fused pallas_call on pre-padded operands.
    fwd = jax.jit(functools.partial(lmgnn_forward_padded,
                                    layer_dims=layer_dims,
                                    n_tools=N_TOOLS, n_steps=N_STEPS))
    loss = fwd(adj_p, x_p, step_p, pos_p, neg_p, w_stack, b_stack)
    loss = jax.block_until_ready(loss)

    ref_bf = _reference_matched(tool_emb, step_emb, tool_adj, pos_tools,
                                neg_tools, weights, biases)
    ref_f32 = _reference_f32(tool_emb, step_emb, tool_adj, pos_tools,
                             neg_tools, weights, biases)

    assert jnp.isfinite(loss), "non-finite loss"
    assert jnp.allclose(loss, ref_bf, rtol=2e-3, atol=2e-3), (loss, ref_bf)
    assert jnp.allclose(loss, ref_f32, rtol=1e-1, atol=1e-1), (loss, ref_f32)

    # Convenience one-shot wrapper also works.
    loss2 = jax.block_until_ready(
        lmgnn_forward(tool_emb, step_emb, tool_adj, pos_tools, neg_tools,
                      weights, biases))
    assert jnp.allclose(loss, loss2, rtol=1e-5, atol=1e-5), (loss, loss2)

    print("KERNEL_OK")
</pallas_src>

<mosaic_0001>
module attributes {stable_mosaic.version = 11 : i64} {
  func.func @_lmgnn_fused_kernel(%arg0: memref<128x128xbf16, #tpu.memory_space<vmem>>, %arg1: memref<128x128xf32, #tpu.memory_space<vmem>>, %arg2: memref<8x128xf32, #tpu.memory_space<vmem>>, %arg3: memref<8x1xi32, #tpu.memory_space<vmem>>, %arg4: memref<8x1xi32, #tpu.memory_space<vmem>>, %arg5: memref<2x128x128xbf16, #tpu.memory_space<vmem>>, %arg6: memref<2x1x128xf32, #tpu.memory_space<vmem>>, %arg7: memref<1x1xf32, #tpu.memory_space<smem>>) attributes {dimension_semantics = [], scalar_prefetch = 0 : i64, scratch_operands = 0 : i64, tpu.core_type = #tpu.core_type<tc>} {
    %c0 = arith.constant 0 : index
    %c0_0 = arith.constant 0 : index
    %0 = vector.load %arg0[%c0, %c0_0] : memref<128x128xbf16, #tpu.memory_space<vmem>>, vector<128x128xbf16>
    %1 = arith.extf %0 : vector<128x128xbf16> to vector<128x128xf32>
    %cst = arith.constant dense<0.000000e+00> : vector<128xf32>
    %2 = vector.multi_reduction <add>, %1, %cst [1] : vector<128x128xf32> to vector<128xf32>
    %3 = vector.shape_cast %2 : vector<128xf32> to vector<128x1xf32>
    %cst_1 = arith.constant 1.000000e+00 : f32
    %4 = vector.broadcast %cst_1 : f32 to vector<128x1xf32>
    %5 = arith.addf %3, %4 : vector<128x1xf32>
    %cst_2 = arith.constant dense<0.000000e+00> : vector<128xf32>
    %6 = vector.multi_reduction <add>, %1, %cst_2 [0] : vector<128x128xf32> to vector<128xf32>
    %7 = vector.shape_cast %6 : vector<128xf32> to vector<1x128xf32>
    %cst_3 = arith.constant 1.000000e+00 : f32
    %8 = vector.broadcast %cst_3 : f32 to vector<1x128xf32>
    %9 = arith.addf %7, %8 : vector<1x128xf32>
    %10 = math.rsqrt %5 : vector<128x1xf32>
    %11 = math.rsqrt %9 : vector<1x128xf32>
    %12 = vector.broadcast %10 : vector<128x1xf32> to vector<128x128xf32>
    %13 = vector.broadcast %11 : vector<1x128xf32> to vector<128x128xf32>
    %14 = arith.mulf %12, %13 : vector<128x128xf32>
    %15 = tpu.iota {dimensions = array<i32: 0>} : vector<128x128xi32>
    %16 = tpu.iota {dimensions = array<i32: 1>} : vector<128x128xi32>
    %17 = arith.cmpi eq, %15, %16 : vector<128x128xi32>
    %18 = arith.mulf %1, %14 : vector<128x128xf32>
    %cst_4 = arith.constant 0.000000e+00 : f32
    %19 = vector.broadcast %cst_4 : f32 to vector<128x128xf32>
    %20 = arith.select %17, %14, %19 : vector<128x128xi1>, vector<128x128xf32>
    %21 = arith.addf %18, %20 : vector<128x128xf32>
    %22 = arith.truncf %21 : vector<128x128xf32> to vector<128x128xbf16>
    %c0_5 = arith.constant 0 : index
    %c0_6 = arith.constant 0 : index
    %23 = vector.load %arg1[%c0_5, %c0_6] : memref<128x128xf32, #tpu.memory_space<vmem>>, vector<128x128xf32>
    %c0_7 = arith.constant 0 : index
    %c0_8 = arith.constant 0 : index
    %c0_9 = arith.constant 0 : index
    %24 = vector.load %arg5[%c0_7, %c0_8, %c0_9] : memref<2x128x128xbf16, #tpu.memory_space<vmem>>, vector<1x128x128xbf16>
    %25 = vector.shape_cast %24 : vector<1x128x128xbf16> to vector<128x128xbf16>
    %c0_10 = arith.constant 0 : index
    %c0_11 = arith.constant 0 : index
    %c0_12 = arith.constant 0 : index
    %26 = vector.load %arg6[%c0_10, %c0_11, %c0_12] : memref<2x1x128xf32, #tpu.memory_space<vmem>>, vector<1x1x128xf32>
    %27 = vector.shape_cast %26 : vector<1x1x128xf32> to vector<1x128xf32>
    %28 = arith.truncf %23 : vector<128x128xf32> to vector<128x128xbf16>
    %cst_13 = arith.constant dense<0.000000e+00> : vector<128x128xf32>
    %29 = tpu.matmul %28, %25, %cst_13 {dimension_numbers = #tpu.dot_dimension_numbers<[1], [0], [0], [1], [0, 0, 1, 1], [], []>} : vector<128x128xbf16>, vector<128x128xbf16>, vector<128x128xf32> -> vector<128x128xf32>
    %30 = arith.truncf %29 : vector<128x128xf32> to vector<128x128xbf16>
    %cst_14 = arith.constant dense<0.000000e+00> : vector<128x128xf32>
    %31 = tpu.matmul %22, %30, %cst_14 {dimension_numbers = #tpu.dot_dimension_numbers<[1], [0], [0], [1], [0, 0, 1, 1], [], []>} : vector<128x128xbf16>, vector<128x128xbf16>, vector<128x128xf32> -> vector<128x128xf32>
    %32 = vector.broadcast %27 : vector<1x128xf32> to vector<128x128xf32>
    %33 = arith.addf %31, %32 : vector<128x128xf32>
    %cst_15 = arith.constant 0.000000e+00 : f32
    %34 = vector.broadcast %cst_15 : f32 to vector<128x128xf32>
    %35 = arith.maximumf %33, %34 : vector<128x128xf32>
    %c1 = arith.constant 1 : index
    %c0_16 = arith.constant 0 : index
    %c0_17 = arith.constant 0 : index
    %36 = vector.load %arg5[%c1, %c0_16, %c0_17] : memref<2x128x128xbf16, #tpu.memory_space<vmem>>, vector<1x128x128xbf16>
    %37 = vector.shape_cast %36 : vector<1x128x128xbf16> to vector<128x128xbf16>
    %c1_18 = arith.constant 1 : index
    %c0_19 = arith.constant 0 : index
    %c0_20 = arith.constant 0 : index
    %38 = vector.load %arg6[%c1_18, %c0_19, %c0_20] : memref<2x1x128xf32, #tpu.memory_space<vmem>>, vector<1x1x128xf32>
    %39 = vector.shape_cast %38 : vector<1x1x128xf32> to vector<1x128xf32>
    %40 = arith.truncf %35 : vector<128x128xf32> to vector<128x128xbf16>
    %cst_21 = arith.constant dense<0.000000e+00> : vector<128x128xf32>
    %41 = tpu.matmul %40, %37, %cst_21 {dimension_numbers = #tpu.dot_dimension_numbers<[1], [0], [0], [1], [0, 0, 1, 1], [], []>} : vector<128x128xbf16>, vector<128x128xbf16>, vector<128x128xf32> -> vector<128x128xf32>
    %42 = arith.truncf %41 : vector<128x128xf32> to vector<128x128xbf16>
    %cst_22 = arith.constant dense<0.000000e+00> : vector<128x128xf32>
    %43 = tpu.matmul %22, %42, %cst_22 {dimension_numbers = #tpu.dot_dimension_numbers<[1], [0], [0], [1], [0, 0, 1, 1], [], []>} : vector<128x128xbf16>, vector<128x128xbf16>, vector<128x128xf32> -> vector<128x128xf32>
    %44 = vector.broadcast %39 : vector<1x128xf32> to vector<128x128xf32>
    %45 = arith.addf %43, %44 : vector<128x128xf32>
    %46 = tpu.iota {dimensions = array<i32: 1>} : vector<8x128xi32>
    %c0_23 = arith.constant 0 : index
    %c0_24 = arith.constant 0 : index
    %47 = vector.load %arg3[%c0_23, %c0_24] : memref<8x1xi32, #tpu.memory_space<vmem>>, vector<8x1xi32>
    %c0_25 = arith.constant 0 : index
    %c0_26 = arith.constant 0 : index
    %48 = vector.load %arg4[%c0_25, %c0_26] : memref<8x1xi32, #tpu.memory_space<vmem>>, vector<8x1xi32>
    %c0_i32 = arith.constant 0 : i32
    %49 = vector.broadcast %c0_i32 : i32 to vector<8x1xi32>
    %50 = arith.cmpi sge, %47, %49 : vector<8x1xi32>
    %c16_i32 = arith.constant 16 : i32
    %51 = vector.broadcast %c16_i32 : i32 to vector<8x1xi32>
    %52 = arith.cmpi slt, %47, %51 : vector<8x1xi32>
    %53 = arith.andi %50, %52 : vector<8x1xi1>
    %c0_i32_27 = arith.constant 0 : i32
    %54 = vector.broadcast %c0_i32_27 : i32 to vector<8x1xi32>
    %55 = arith.cmpi sge, %48, %54 : vector<8x1xi32>
    %c16_i32_28 = arith.constant 16 : i32
    %56 = vector.broadcast %c16_i32_28 : i32 to vector<8x1xi32>
    %57 = arith.cmpi slt, %48, %56 : vector<8x1xi32>
    %58 = arith.andi %55, %57 : vector<8x1xi1>
    %59 = vector.broadcast %47 : vector<8x1xi32> to vector<8x128xi32>
    %60 = arith.cmpi eq, %46, %59 : vector<8x128xi32>
    %61 = vector.broadcast %53 : vector<8x1xi1> to vector<8x128xi1>
    %62 = arith.andi %60, %61 : vector<8x128xi1>
    %63 = vector.broadcast %48 : vector<8x1xi32> to vector<8x128xi32>
    %64 = arith.cmpi eq, %46, %63 : vector<8x128xi32>
    %65 = vector.broadcast %58 : vector<8x1xi1> to vector<8x128xi1>
    %66 = arith.andi %64, %65 : vector<8x128xi1>
    %67 = arith.extui %66 : vector<8x128xi1> to vector<8x128xi32>
    %68 = arith.sitofp %67 : vector<8x128xi32> to vector<8x128xf32>
    %69 = arith.extui %62 : vector<8x128xi1> to vector<8x128xi32>
    %70 = arith.sitofp %69 : vector<8x128xi32> to vector<8x128xf32>
    %71 = arith.subf %68, %70 : vector<8x128xf32>
    %72 = arith.truncf %71 : vector<8x128xf32> to vector<8x128xbf16>
    %73 = arith.truncf %45 : vector<128x128xf32> to vector<128x128xbf16>
    %cst_29 = arith.constant dense<0.000000e+00> : vector<8x128xf32>
    %74 = tpu.matmul %72, %73, %cst_29 {dimension_numbers = #tpu.dot_dimension_numbers<[1], [0], [0], [1], [0, 0, 1, 1], [], []>} : vector<8x128xbf16>, vector<128x128xbf16>, vector<8x128xf32> -> vector<8x128xf32>
    %c0_30 = arith.constant 0 : index
    %c0_31 = arith.constant 0 : index
    %75 = vector.load %arg2[%c0_30, %c0_31] : memref<8x128xf32, #tpu.memory_space<vmem>>, vector<8x128xf32>
    %76 = arith.mulf %75, %74 : vector<8x128xf32>
    %cst_32 = arith.constant dense<0.000000e+00> : vector<8xf32>
    %77 = vector.multi_reduction <add>, %76, %cst_32 [1] : vector<8x128xf32> to vector<8xf32>
    %78 = vector.shape_cast %77 : vector<8xf32> to vector<8x1xf32>
    %cst_33 = arith.constant 0.000000e+00 : f32
    %79 = vector.broadcast %cst_33 : f32 to vector<8x1xf32>
    %80 = arith.maximumf %78, %79 : vector<8x1xf32>
    %81 = math.absf %78 : vector<8x1xf32>
    %cst_34 = arith.constant 0.000000e+00 : f32
    %82 = vector.broadcast %cst_34 : f32 to vector<8x1xf32>
    %83 = arith.subf %82, %81 : vector<8x1xf32>
    %84 = math.exp %83 : vector<8x1xf32>
    %85 = math.log1p %84 : vector<8x1xf32>
    %86 = arith.addf %80, %85 : vector<8x1xf32>
    %87 = tpu.iota {dimensions = array<i32: 0>} : vector<8x1xi32>
    %c8_i32 = arith.constant 8 : i32
    %88 = vector.broadcast %c8_i32 : i32 to vector<8x1xi32>
    %89 = arith.cmpi slt, %87, %88 : vector<8x1xi32>
    %90 = arith.extui %89 : vector<8x1xi1> to vector<8x1xi32>
    %91 = arith.sitofp %90 : vector<8x1xi32> to vector<8x1xf32>
    %92 = arith.mulf %86, %91 : vector<8x1xf32>
    %93 = vector.shape_cast %92 : vector<8x1xf32> to vector<1x8x1xf32>
    %cst_35 = arith.constant dense<0.000000e+00> : vector<1xf32>
    %94 = vector.multi_reduction <add>, %93, %cst_35 [1, 2] : vector<1x8x1xf32> to vector<1xf32>
    %95 = vector.shape_cast %94 : vector<1xf32> to vector<1x1x1xf32>
    %96 = vector.extract %95[0, 0, 0] : f32 from vector<1x1x1xf32>
    %cst_36 = arith.constant 1.250000e-01 : f32
    %97 = arith.mulf %96, %cst_36 : f32
    %c0_37 = arith.constant 0 : index
    %c0_38 = arith.constant 0 : index
    %98 = memref.load %arg7[%c0_37, %c0_38] : memref<1x1xf32, #tpu.memory_space<smem>>
    memref.store %97, %arg7[%c0_37, %c0_38] : memref<1x1xf32, #tpu.memory_space<smem>>
    return
  }
}

</mosaic_0001>

<llo_original>
// kernel: lmgnn_forward_padded.1
$region0: #{lmgnn_forward_padded.1}
  #allocation0 [shape = 'u32[]', space=smem, size = 0x4, offset = 0x4, fixed_abs, tag = 'smem constant byte address 0x4 - core index']
  #allocation1 [shape = 'u32[144,128]{1,0:T(1,128)}', space=vmem, size = 0x12000, scoped, tag = 'internal scratch']
  %s0 = inlined_call_operand.hbm [shape: bf16[128,128], index: 0, kind: input, shape index: {}]
  %s1 = inlined_call_operand.hbm [shape: f32[128,128], index: 1, kind: input, shape index: {}]
  %s2 = inlined_call_operand.vmem [shape: f32[8,128], index: 2, kind: input, shape index: {}]
  %s3 = inlined_call_operand.vmem [shape: s32[8,1], index: 3, kind: input, shape index: {}]
  %s4 = inlined_call_operand.vmem [shape: s32[8,1], index: 4, kind: input, shape index: {}]
  %s5 = inlined_call_operand.hbm [shape: bf16[2,128,128], index: 5, kind: input, shape index: {}]
  %s6 = inlined_call_operand.vmem [shape: f32[2,1,128], index: 6, kind: input, shape index: {}]
  %s7 = inlined_call_operand.hbm [shape: f32[1,1], index: 7, kind: output, shape index: {}]
  %s8 = sld [smem:[#allocation0]]
  $region50: #{lmgnn_forward_padded.1} parent=0
    _
  %s10 = ssub.s32 1, %s8
  %s11 = scalar_select 0, %s10, %s8
  $region1: #{lmgnn_forward_padded.1} parent=0
    #allocation2 [shape = 'u8[32768]{0}', space=vmem, size = 0x8000, scoped, tag = 'input window, operand 0, single buffered']
    #allocation3 [shape = 's32[1]{0}', space=sflag, size = 0x4, scoped, tag = 'scoped memory for lmgnn_forward_padded.1']
    #allocation4 [shape = 's32[1]{0}', space=sflag, size = 0x4, scoped, tag = 'scoped memory for lmgnn_forward_padded.1']
    #allocation5 [shape = 'u8[65536]{0}', space=vmem, size = 0x10000, scoped, tag = 'input window, operand 1, single buffered']
    #allocation6 [shape = 's32[1]{0}', space=sflag, size = 0x4, scoped, tag = 'scoped memory for lmgnn_forward_padded.1']
    #allocation7 [shape = 'u8[65536]{0}', space=vmem, size = 0x10000, scoped, tag = 'input window, operand 5, single buffered']
    #allocation8 [shape = 'u8[512]{0}', space=smem, size = 0x200, scoped, tag = 'output window, operand 0, single buffered']
    %12 = vsyncpa [#allocation3], 0
    %13 = vsyncpa [#allocation6], 0
    %14 = vsyncpa [#allocation4], 0
    // Predicated region
    $region2: #{lmgnn_forward_padded.1} parent=1 // pred_check
      _
    $region3: #{lmgnn_forward_padded.1} parent=1 // pred_check_branch
      %16 = sbr.rel (0) target = $region5
    $region4: #{lmgnn_forward_padded.1} parent=1 // pred_region
      %s18 = ssub.s32 1024, 1024
      %19 = vsyncadd [#allocation3], %s18
      %s20 = sshll.u32 [#allocation2], 4
      %s21 = int_to_ptr.vmem [resolvable:$true] %s20
      %26 = dma.hbm_to_vmem [thread:$0]  %s0, 1024, %s21, [#allocation3], 64, 64, 4
    $region5: #{lmgnn_forward_padded.1} parent=1 // pred_fallthru
      _
    // Predicated region
    $region6: #{lmgnn_forward_padded.1} parent=1 // pred_check
      _
    $region7: #{lmgnn_forward_padded.1} parent=1 // pred_check_branch
      %28 = sbr.rel (0) target = $region9
    $region8: #{lmgnn_forward_padded.1} parent=1 // pred_region
      %s30 = ssub.s32 2048, 2048
      %31 = vsyncadd [#allocation6], %s30
      %s32 = sshll.u32 [#allocation5], 4
      %s33 = int_to_ptr.vmem [resolvable:$true] %s32
      %38 = dma.hbm_to_vmem [thread:$0]  %s1, 2048, %s33, [#allocation6], 128, 128, 8
    $region9: #{lmgnn_forward_padded.1} parent=1 // pred_fallthru
      _
    // Predicated region
    $region10: #{lmgnn_forward_padded.1} parent=1 // pred_check
      _
    $region11: #{lmgnn_forward_padded.1} parent=1 // pred_check_branch
      %40 = sbr.rel (0) target = $region13
    $region12: #{lmgnn_forward_padded.1} parent=1 // pred_region
      _
    $region13: #{lmgnn_forward_padded.1} parent=1 // pred_fallthru
      _
    // Predicated region
    $region14: #{lmgnn_forward_padded.1} parent=1 // pred_check
      _
    $region15: #{lmgnn_forward_padded.1} parent=1 // pred_check_branch
      %42 = sbr.rel (0) target = $region17
    $region16: #{lmgnn_forward_padded.1} parent=1 // pred_region
      _
    $region17: #{lmgnn_forward_padded.1} parent=1 // pred_fallthru
      _
    // Predicated region
    $region18: #{lmgnn_forward_padded.1} parent=1 // pred_check
      _
    $region19: #{lmgnn_forward_padded.1} parent=1 // pred_check_branch
      %44 = sbr.rel (0) target = $region21
    $region20: #{lmgnn_forward_padded.1} parent=1 // pred_region
      _
    $region21: #{lmgnn_forward_padded.1} parent=1 // pred_fallthru
      _
    // Predicated region
    $region22: #{lmgnn_forward_padded.1} parent=1 // pred_check
      _
    $region23: #{lmgnn_forward_padded.1} parent=1 // pred_check_branch
      %46 = sbr.rel (0) target = $region25
    $region24: #{lmgnn_forward_padded.1} parent=1 // pred_region
      %s48 = ssub.s32 2048, 2048
      %49 = vsyncadd [#allocation6], %s48
      %s50 = sshll.u32 [#allocation7], 4
      %s51 = int_to_ptr.vmem [resolvable:$true] %s50
      %56 = dma.hbm_to_vmem [thread:$0]  %s5, 2048, %s51, [#allocation6], 64, 64, 4
    $region25: #{lmgnn_forward_padded.1} parent=1 // pred_fallthru
      _
    // Predicated region
    $region26: #{lmgnn_forward_padded.1} parent=1 // pred_check
      _
    $region27: #{lmgnn_forward_padded.1} parent=1 // pred_check_branch
      %58 = sbr.rel (0) target = $region29
    $region28: #{lmgnn_forward_padded.1} parent=1 // pred_region
      _
    $region29: #{lmgnn_forward_padded.1} parent=1 // pred_fallthru
      _
    // Predicated region
    $region30: #{lmgnn_forward_padded.1} parent=1 // pred_check
      _
    $region31: #{lmgnn_forward_padded.1} parent=1 // pred_check_branch
      %60 = sbr.rel (0) target = $region33
    $region32: #{lmgnn_forward_padded.1} parent=1 // pred_region
      %61 = dma.done [#allocation3], 1024
    $region33: #{lmgnn_forward_padded.1} parent=1 // pred_fallthru
      _
    // Predicated region
    $region34: #{lmgnn_forward_padded.1} parent=1 // pred_check
      _
    $region35: #{lmgnn_forward_padded.1} parent=1 // pred_check_branch
      %63 = sbr.rel (0) target = $region37
    $region36: #{lmgnn_forward_padded.1} parent=1 // pred_region
      %64 = dma.done [#allocation6], 2048
    $region37: #{lmgnn_forward_padded.1} parent=1 // pred_fallthru
      _
    // Predicated region
    $region38: #{lmgnn_forward_padded.1} parent=1 // pred_check
      _
    $region39: #{lmgnn_forward_padded.1} parent=1 // pred_check_branch
      %66 = sbr.rel (0) target = $region41
    $region40: #{lmgnn_forward_padded.1} parent=1 // pred_region
      %67 = dma.done [#allocation6], 2048
    $region41: #{lmgnn_forward_padded.1} parent=1 // pred_fallthru
      _
    %v69 = vld [vmem:[#allocation2] sm:$0xf]
    %v70 = vld [vmem:[#allocation2 + $0x4] sm:$0xf]
    %v71 = vld [vmem:[#allocation2 + $0x8] sm:$0xf]
    %v72 = vld [vmem:[#allocation2 + $0xc] sm:$0xf]
    %v73 = vld [vmem:[#allocation2 + $0x10] sm:$0xf]
    %v74 = vld [vmem:[#allocation2 + $0x14] sm:$0xf]
    %v75 = vld [vmem:[#allocation2 + $0x18] sm:$0xf]
    %v76 = vld [vmem:[#allocation2 + $0x1c] sm:$0xf]
    %v77 = vld [vmem:[#allocation2 + $0x20] sm:$0xf]
    %v78 = vld [vmem:[#allocation2 + $0x24] sm:$0xf]
    %v79 = vld [vmem:[#allocation2 + $0x28] sm:$0xf]
    %v80 = vld [vmem:[#allocation2 + $0x2c] sm:$0xf]
    %v81 = vld [vmem:[#allocation2 + $0x30] sm:$0xf]
    %v82 = vld [vmem:[#allocation2 + $0x34] sm:$0xf]
    %v83 = vld [vmem:[#allocation2 + $0x38] sm:$0xf]
    %v84 = vld [vmem:[#allocation2 + $0x3c] sm:$0xf]
    %v85 = vunpack.c.l.bf16 %v69
    %v86 = vunpack.c.l.bf16 %v70
    %v87 = vunpack.c.l.bf16 %v71
    %v88 = vunpack.c.l.bf16 %v72
    %v89 = vunpack.c.l.bf16 %v73
    %v90 = vunpack.c.l.bf16 %v74
    %v91 = vunpack.c.l.bf16 %v75
    %v92 = vunpack.c.l.bf16 %v76
    %v93 = vunpack.c.l.bf16 %v77
    %v94 = vunpack.c.l.bf16 %v78
    %v95 = vunpack.c.l.bf16 %v79
    %v96 = vunpack.c.l.bf16 %v80
    %v97 = vunpack.c.l.bf16 %v81
    %v98 = vunpack.c.l.bf16 %v82
    %v99 = vunpack.c.l.bf16 %v83
    %v100 = vunpack.c.l.bf16 %v84
    %101 = vadd.xlane.f32.xlu0 %v85
    %v102 = vpop.xlane.xlu0 %101
    %103 = vadd.xlane.f32.xlu0 %v86
    %v104 = vpop.xlane.xlu0 %103
    %105 = vadd.xlane.f32.xlu0 %v87
    %v106 = vpop.xlane.xlu0 %105
    %107 = vadd.xlane.f32.xlu0 %v88
    %v108 = vpop.xlane.xlu0 %107
    %109 = vadd.xlane.f32.xlu0 %v89
    %v110 = vpop.xlane.xlu0 %109
    %111 = vadd.xlane.f32.xlu0 %v90
    %v112 = vpop.xlane.xlu0 %111
    %113 = vadd.xlane.f32.xlu0 %v91
    %v114 = vpop.xlane.xlu0 %113
    %115 = vadd.xlane.f32.xlu0 %v92
    %v116 = vpop.xlane.xlu0 %115
    %117 = vadd.xlane.f32.xlu0 %v93
    %v118 = vpop.xlane.xlu0 %117
    %119 = vadd.xlane.f32.xlu0 %v94
    %v120 = vpop.xlane.xlu0 %119
    %121 = vadd.xlane.f32.xlu0 %v95
    %v122 = vpop.xlane.xlu0 %121
    %123 = vadd.xlane.f32.xlu0 %v96
    %v124 = vpop.xlane.xlu0 %123
    %125 = vadd.xlane.f32.xlu0 %v97
    %v126 = vpop.xlane.xlu0 %125
    %127 = vadd.xlane.f32.xlu0 %v98
    %v128 = vpop.xlane.xlu0 %127
    %129 = vadd.xlane.f32.xlu0 %v99
    %v130 = vpop.xlane.xlu0 %129
    %131 = vadd.xlane.f32.xlu0 %v100
    %v132 = vpop.xlane.xlu0 %131
    %v133 = vadd.f32 %v102, 1.0
    %v134 = vadd.f32 %v104, 1.0
    %v135 = vadd.f32 %v106, 1.0
    %v136 = vadd.f32 %v108, 1.0
    %v137 = vadd.f32 %v110, 1.0
    %v138 = vadd.f32 %v112, 1.0
    %v139 = vadd.f32 %v114, 1.0
    %v140 = vadd.f32 %v116, 1.0
    %v141 = vadd.f32 %v118, 1.0
    %v142 = vadd.f32 %v120, 1.0
    %v143 = vadd.f32 %v122, 1.0
    %v144 = vadd.f32 %v124, 1.0
    %v145 = vadd.f32 %v126, 1.0
    %v146 = vadd.f32 %v128, 1.0
    %v147 = vadd.f32 %v130, 1.0
    %v148 = vadd.f32 %v132, 1.0
    %v149 = vadd.f32 %v85, %v86
    %v150 = vadd.f32 %v149, %v87
    %v151 = vadd.f32 %v150, %v88
    %v152 = vadd.f32 %v151, %v89
    %v153 = vadd.f32 %v152, %v90
    %v154 = vadd.f32 %v153, %v91
    %v155 = vadd.f32 %v154, %v92
    %v156 = vadd.f32 %v155, %v93
    %v157 = vadd.f32 %v156, %v94
    %v158 = vadd.f32 %v157, %v95
    %v159 = vadd.f32 %v158, %v96
    %v160 = vadd.f32 %v159, %v97
    %v161 = vadd.f32 %v160, %v98
    %v162 = vadd.f32 %v161, %v99
    %v163 = vadd.f32 %v162, %v100
    %v164 = vrot.slane %v163, 4
    %v165 = vadd.f32 %v163, %v164
    %v166 = vrot.slane %v165, 2
    %v167 = vadd.f32 %v165, %v166
    %v168 = vrot.slane %v167, 1
    %v169 = vadd.f32 %v167, %v168
    %v170 = vadd.f32 %v169, 1.0
    %v171 = vrsqrt.pop %v133
    %v172 = vrsqrt.pop %v134
    %v173 = vrsqrt.pop %v135
    %v174 = vrsqrt.pop %v136
    %v175 = vrsqrt.pop %v137
    %v176 = vrsqrt.pop %v138
    %v177 = vrsqrt.pop %v139
    %v178 = vrsqrt.pop %v140
    %v179 = vrsqrt.pop %v141
    %v180 = vrsqrt.pop %v142
    %v181 = vrsqrt.pop %v143
    %v182 = vrsqrt.pop %v144
    %v183 = vrsqrt.pop %v145
    %v184 = vrsqrt.pop %v146
    %v185 = vrsqrt.pop %v147
    %v186 = vrsqrt.pop %v148
    %v187 = vrsqrt.pop %v170
    %v188 = vmul.f32 %v171, %v187
    %v189 = vmul.f32 %v172, %v187
    %v190 = vmul.f32 %v173, %v187
    %v191 = vmul.f32 %v174, %v187
    %v192 = vmul.f32 %v175, %v187
    %v193 = vmul.f32 %v176, %v187
    %v194 = vmul.f32 %v177, %v187
    %v195 = vmul.f32 %v178, %v187
    %v196 = vmul.f32 %v179, %v187
    %v197 = vmul.f32 %v180, %v187
    %v198 = vmul.f32 %v181, %v187
    %v199 = vmul.f32 %v182, %v187
    %v200 = vmul.f32 %v183, %v187
    %v201 = vmul.f32 %v184, %v187
    %v202 = vmul.f32 %v185, %v187
    %v203 = vmul.f32 %v186, %v187
    %v204 = vlaneseq
    %v205 = vshrl.u32 %v204, 7
    %v206 = vadd.s32 %v205, 8
    %v207 = vadd.s32 %v205, 16
    %v208 = vadd.s32 %v205, 24
    %v209 = vadd.s32 %v205, 32
    %v210 = vadd.s32 %v205, 40
    %v211 = vadd.s32 %v205, 48
    %v212 = vadd.s32 %v205, 56
    %v213 = vadd.s32 %v205, 64
    %v214 = vadd.s32 %v205, 72
    %v215 = vadd.s32 %v205, 80
    %v216 = vadd.s32 %v205, 88
    %v217 = vadd.s32 %v205, 96
    %v218 = vadd.s32 %v205, 104
    %v219 = vadd.s32 %v205, 112
    %v220 = vadd.s32 %v205, 120
    %v221 = vlaneseq
    %v222 = vand.u32 %v221, 127
    %vm223 = vcmp.eq.s32.totalorder %v205, %v222
    %vm224 = vcmp.eq.s32.totalorder %v206, %v222
    %vm225 = vcmp.eq.s32.totalorder %v207, %v222
    %vm226 = vcmp.eq.s32.totalorder %v208, %v222
    %vm227 = vcmp.eq.s32.totalorder %v209, %v222
    %vm228 = vcmp.eq.s32.totalorder %v210, %v222
    %vm229 = vcmp.eq.s32.totalorder %v211, %v222
    %vm230 = vcmp.eq.s32.totalorder %v212, %v222
    %vm231 = vcmp.eq.s32.totalorder %v213, %v222
    %vm232 = vcmp.eq.s32.totalorder %v214, %v222
    %vm233 = vcmp.eq.s32.totalorder %v215, %v222
    %vm234 = vcmp.eq.s32.totalorder %v216, %v222
    %vm235 = vcmp.eq.s32.totalorder %v217, %v222
    %vm236 = vcmp.eq.s32.totalorder %v218, %v222
    %vm237 = vcmp.eq.s32.totalorder %v219, %v222
    %vm238 = vcmp.eq.s32.totalorder %v220, %v222
    %v239 = vmul.f32 %v85, %v188
    %v240 = vmul.f32 %v86, %v189
    %v241 = vmul.f32 %v87, %v190
    %v242 = vmul.f32 %v88, %v191
    %v243 = vmul.f32 %v89, %v192
    %v244 = vmul.f32 %v90, %v193
    %v245 = vmul.f32 %v91, %v194
    %v246 = vmul.f32 %v92, %v195
    %v247 = vmul.f32 %v93, %v196
    %v248 = vmul.f32 %v94, %v197
    %v249 = vmul.f32 %v95, %v198
    %v250 = vmul.f32 %v96, %v199
    %v251 = vmul.f32 %v97, %v200
    %v252 = vmul.f32 %v98, %v201
    %v253 = vmul.f32 %v99, %v202
    %v254 = vmul.f32 %v100, %v203
    %v255 = vsel %vm223, %v188, 0.0
    %v256 = vsel %vm224, %v189, 0.0
    %v257 = vsel %vm225, %v190, 0.0
    %v258 = vsel %vm226, %v191, 0.0
    %v259 = vsel %vm227, %v192, 0.0
    %v260 = vsel %vm228, %v193, 0.0
    %v261 = vsel %vm229, %v194, 0.0
    %v262 = vsel %vm230, %v195, 0.0
    %v263 = vsel %vm231, %v196, 0.0
    %v264 = vsel %vm232, %v197, 0.0
    %v265 = vsel %vm233, %v198, 0.0
    %v266 = vsel %vm234, %v199, 0.0
    %v267 = vsel %vm235, %v200, 0.0
    %v268 = vsel %vm236, %v201, 0.0
    %v269 = vsel %vm237, %v202, 0.0
    %v270 = vsel %vm238, %v203, 0.0
    %v271 = vadd.f32 %v239, %v255
    %v272 = vadd.f32 %v240, %v256
    %v273 = vadd.f32 %v241, %v257
    %v274 = vadd.f32 %v242, %v258
    %v275 = vadd.f32 %v243, %v259
    %v276 = vadd.f32 %v244, %v260
    %v277 = vadd.f32 %v245, %v261
    %v278 = vadd.f32 %v246, %v262
    %v279 = vadd.f32 %v247, %v263
    %v280 = vadd.f32 %v248, %v264
    %v281 = vadd.f32 %v249, %v265
    %v282 = vadd.f32 %v250, %v266
    %v283 = vadd.f32 %v251, %v267
    %v284 = vadd.f32 %v252, %v268
    %v285 = vadd.f32 %v253, %v269
    %v286 = vadd.f32 %v254, %v270
    %v287 = vpack.c.bf16 %v272, %v271
    %v288 = vpack.c.bf16 %v274, %v273
    %v289 = vpack.c.bf16 %v276, %v275
    %v290 = vpack.c.bf16 %v278, %v277
    %v291 = vpack.c.bf16 %v280, %v279
    %v292 = vpack.c.bf16 %v282, %v281
    %v293 = vpack.c.bf16 %v284, %v283
    %v294 = vpack.c.bf16 %v286, %v285
    %v295 = vld [vmem:[#allocation5] sm:$0xff]
    %v296 = vld [vmem:[#allocation5 + $0x8] sm:$0xff]
    %v297 = vld [vmem:[#allocation5 + $0x10] sm:$0xff]
    %v298 = vld [vmem:[#allocation5 + $0x18] sm:$0xff]
    %v299 = vld [vmem:[#allocation5 + $0x20] sm:$0xff]
    %v300 = vld [vmem:[#allocation5 + $0x28] sm:$0xff]
    %v301 = vld [vmem:[#allocation5 + $0x30] sm:$0xff]
    %v302 = vld [vmem:[#allocation5 + $0x38] sm:$0xff]
    %v303 = vld [vmem:[#allocation5 + $0x40] sm:$0xff]
    %v304 = vld [vmem:[#allocation5 + $0x48] sm:$0xff]
    %v305 = vld [vmem:[#allocation5 + $0x50] sm:$0xff]
    %v306 = vld [vmem:[#allocation5 + $0x58] sm:$0xff]
    %v307 = vld [vmem:[#allocation5 + $0x60] sm:$0xff]
    %v308 = vld [vmem:[#allocation5 + $0x68] sm:$0xff]
    %v309 = vld [vmem:[#allocation5 + $0x70] sm:$0xff]
    %v310 = vld [vmem:[#allocation5 + $0x78] sm:$0xff]
    %v311 = vld [vmem:[#allocation7] sm:$0xf]
    %v312 = vld [vmem:[#allocation7 + $0x4] sm:$0xf]
    %v313 = vld [vmem:[#allocation7 + $0x8] sm:$0xf]
    %v314 = vld [vmem:[#allocation7 + $0xc] sm:$0xf]
    %v315 = vld [vmem:[#allocation7 + $0x10] sm:$0xf]
    %v316 = vld [vmem:[#allocation7 + $0x14] sm:$0xf]
    %v317 = vld [vmem:[#allocation7 + $0x18] sm:$0xf]
    %v318 = vld [vmem:[#allocation7 + $0x1c] sm:$0xf]
    %v319 = vld [vmem:[#allocation7 + $0x20] sm:$0xf]
    %v320 = vld [vmem:[#allocation7 + $0x24] sm:$0xf]
    %v321 = vld [vmem:[#allocation7 + $0x28] sm:$0xf]
    %v322 = vld [vmem:[#allocation7 + $0x2c] sm:$0xf]
    %v323 = vld [vmem:[#allocation7 + $0x30] sm:$0xf]
    %v324 = vld [vmem:[#allocation7 + $0x34] sm:$0xf]
    %v325 = vld [vmem:[#allocation7 + $0x38] sm:$0xf]
    %v326 = vld [vmem:[#allocation7 + $0x3c] sm:$0xf]
    %v327 = vld [vmem:[%s6] sm:$0x1]
    %v328 = vpack.c.bf16 %v296, %v295
    %v329 = vpack.c.bf16 %v298, %v297
    %v330 = vpack.c.bf16 %v300, %v299
    %v331 = vpack.c.bf16 %v302, %v301
    %v332 = vpack.c.bf16 %v304, %v303
    %v333 = vpack.c.bf16 %v306, %v305
    %v334 = vpack.c.bf16 %v308, %v307
    %v335 = vpack.c.bf16 %v310, %v309
    %v352 = vunpack.c.l.b16 %v311
    %v353 = vunpack.c.l.b16 %v312
    %v354 = vunpack.c.l.b16 %v313
    %v355 = vunpack.c.l.b16 %v314
    %v356 = vunpack.c.l.b16 %v315
    %v357 = vunpack.c.l.b16 %v316
    %v358 = vunpack.c.l.b16 %v317
    %v359 = vunpack.c.l.b16 %v318
    %v360 = vunpack.c.l.b16 %v319
    %v361 = vunpack.c.l.b16 %v320
    %v362 = vunpack.c.l.b16 %v321
    %v363 = vunpack.c.l.b16 %v322
    %v364 = vunpack.c.l.b16 %v323
    %v365 = vunpack.c.l.b16 %v324
    %v366 = vunpack.c.l.b16 %v325
    %v367 = vunpack.c.l.b16 %v326
    %v368 = vpack.c.b16 %v353, %v352
    %v369 = vpack.c.b16 %v355, %v354
    %v370 = vpack.c.b16 %v357, %v356
    %v371 = vpack.c.b16 %v359, %v358
    %v372 = vpack.c.b16 %v361, %v360
    %v373 = vpack.c.b16 %v363, %v362
    %v374 = vpack.c.b16 %v365, %v364
    %v375 = vpack.c.b16 %v367, %v366
    %384 = vmatprep.subr.bf16.mxu0 0
    %385 = vmatpush1.bf16.msra.mxu0 %v368
    %386 = vmatprep.subr.bf16.mxu0 0
    %387 = vmatpush1.bf16.msra.mxu0 %v369
    %388 = vmatprep.subr.bf16.mxu0 0
    %389 = vmatpush1.bf16.msra.mxu0 %v370
    %390 = vmatprep.subr.bf16.mxu0 0
    %391 = vmatpush1.bf16.msra.mxu0 %v371
    %392 = vmatprep.subr.bf16.mxu0 0
    %393 = vmatpush1.bf16.msra.mxu0 %v372
    %394 = vmatprep.subr.bf16.mxu0 0
    %395 = vmatpush1.bf16.msra.mxu0 %v373
    %396 = vmatprep.subr.bf16.mxu0 0
    %397 = vmatpush1.bf16.msra.mxu0 %v374
    %398 = vmatprep.subr.bf16.mxu0 0
    %399 = vmatpush1.bf16.msra.mxu0 %v375
    %400 = vmatprep.subr.bf16.mxu0 0
    %401 = vmatpush1.bf16.msra.mxu0 0
    %402 = vmatprep.subr.bf16.mxu0 0
    %403 = vmatpush1.bf16.msra.mxu0 0
    %404 = vmatprep.subr.bf16.mxu0 0
    %405 = vmatpush1.bf16.msra.mxu0 0
    %406 = vmatprep.subr.bf16.mxu0 0
    %407 = vmatpush1.bf16.msra.mxu0 0
    %408 = vmatprep.subr.bf16.mxu0 0
    %409 = vmatpush1.bf16.msra.mxu0 0
    %410 = vmatprep.subr.bf16.mxu0 0
    %411 = vmatpush1.bf16.msra.mxu0 0
    %412 = vmatprep.subr.bf16.mxu0 0
    %413 = vmatpush1.bf16.msra.mxu0 0
    %414 = vmatprep.subr.bf16.mxu0 0
    %415 = vmatpush1.bf16.msra.mxu0 0
    %416 = vmatprep.mubr.bf16.mxu0 0
    %417 = vmatmul.mubr.bf16.gmra.mrb[0].mxu0 %v328
    %v418 = vpop.f32.mrb[0].mxu0
    %v419 = vadd.f32 0.0, %v418
    %v420 = vpop.f32.mrb[0].mxu0
    %v421 = vpop.f32.mrb[0].mxu0
    %v422 = vadd.f32 0.0, %v421
    %v423 = vpop.f32.mrb[0].mxu0
    %424 = vmatprep.mubr.bf16.mxu0 0
    %425 = vmatmul.mubr.bf16.gmra.mrb[0].mxu0 %v329
    %v426 = vpop.f32.mrb[0].mxu0
    %v427 = vadd.f32 0.0, %v426
    %v428 = vpop.f32.mrb[0].mxu0
    %v429 = vpop.f32.mrb[0].mxu0
    %v430 = vadd.f32 0.0, %v429
    %v431 = vpop.f32.mrb[0].mxu0
    %432 = vmatprep.mubr.bf16.mxu0 0
    %433 = vmatmul.mubr.bf16.gmra.mrb[0].mxu0 %v330
    %v434 = vpop.f32.mrb[0].mxu0
    %v435 = vadd.f32 0.0, %v434
    %v436 = vpop.f32.mrb[0].mxu0
    %v437 = vpop.f32.mrb[0].mxu0
    %v438 = vadd.f32 0.0, %v437
    %v439 = vpop.f32.mrb[0].mxu0
    %440 = vmatprep.mubr.bf16.mxu0 0
    %441 = vmatmul.mubr.bf16.gmra.mrb[0].mxu0 %v331
    %v442 = vpop.f32.mrb[0].mxu0
    %v443 = vadd.f32 0.0, %v442
    %v444 = vpop.f32.mrb[0].mxu0
    %v445 = vpop.f32.mrb[0].mxu0
    %v446 = vadd.f32 0.0, %v445
    %v447 = vpop.f32.mrb[0].mxu0
    %448 = vmatprep.mubr.bf16.mxu0 0
    %449 = vmatmul.mubr.bf16.gmra.mrb[0].mxu0 %v332
    %v450 = vpop.f32.mrb[0].mxu0
    %v451 = vadd.f32 0.0, %v450
    %v452 = vpop.f32.mrb[0].mxu0
    %v453 = vpop.f32.mrb[0].mxu0
    %v454 = vadd.f32 0.0, %v453
    %v455 = vpop.f32.mrb[0].mxu0
    %456 = vmatprep.mubr.bf16.mxu0 0
    %457 = vmatmul.mubr.bf16.gmra.mrb[0].mxu0 %v333
    %v458 = vpop.f32.mrb[0].mxu0
    %v459 = vadd.f32 0.0, %v458
    %v460 = vpop.f32.mrb[0].mxu0
    %v461 = vpop.f32.mrb[0].mxu0
    %v462 = vadd.f32 0.0, %v461
    %v463 = vpop.f32.mrb[0].mxu0
    %464 = vmatprep.mubr.bf16.mxu0 0
    %465 = vmatmul.mubr.bf16.gmra.mrb[0].mxu0 %v334
    %v466 = vpop.f32.mrb[0].mxu0
    %v467 = vadd.f32 0.0, %v466
    %v468 = vpop.f32.mrb[0].mxu0
    %v469 = vpop.f32.mrb[0].mxu0
    %v470 = vadd.f32 0.0, %v469
    %v471 = vpop.f32.mrb[0].mxu0
    %472 = vmatprep.mubr.bf16.mxu0 0
    %473 = vmatmul.mubr.bf16.gmra.mrb[0].mxu0 %v335
    %v474 = vpop.f32.mrb[0].mxu0
    %v475 = vadd.f32 0.0, %v474
    %v476 = vpop.f32.mrb[0].mxu0
    %v477 = vpop.f32.mrb[0].mxu0
    %v478 = vadd.f32 0.0, %v477
    %v479 = vpop.f32.mrb[0].mxu0
    %480 = vdwg.mxu0
    %v481 = vpack.c.bf16 %v422, %v419
    %v482 = vpack.c.bf16 %v430, %v427
    %v483 = vpack.c.bf16 %v438, %v435
    %v484 = vpack.c.bf16 %v446, %v443
    %v485 = vpack.c.bf16 %v454, %v451
    %v486 = vpack.c.bf16 %v462, %v459
    %v487 = vpack.c.bf16 %v470, %v467
    %v488 = vpack.c.bf16 %v478, %v475
    %v490 = vlaneseq
    %v491 = vshrl.u32 %v490, 7
    %v492 = vsub.s32 0, %v491
    %v493 = vrot.slane %v327, %v492
    %495 = vmatprep.subr.bf16.mxu0 0
    %496 = vmatpush1.bf16.msra.mxu0 %v481
    %497 = vmatprep.subr.bf16.mxu0 0
    %498 = vmatpush1.bf16.msra.mxu0 %v482
    %499 = vmatprep.subr.bf16.mxu0 0
    %500 = vmatpush1.bf16.msra.mxu0 %v483
    %501 = vmatprep.subr.bf16.mxu0 0
    %502 = vmatpush1.bf16.msra.mxu0 %v484
    %503 = vmatprep.subr.bf16.mxu0 0
    %504 = vmatpush1.bf16.msra.mxu0 %v485
    %505 = vmatprep.subr.bf16.mxu0 0
    %506 = vmatpush1.bf16.msra.mxu0 %v486
    %507 = vmatprep.subr.bf16.mxu0 0
    %508 = vmatpush1.bf16.msra.mxu0 %v487
    %509 = vmatprep.subr.bf16.mxu0 0
    %510 = vmatpush1.bf16.msra.mxu0 %v488
    %511 = vmatprep.subr.bf16.mxu0 0
    %512 = vmatpush1.bf16.msra.mxu0 0
    %513 = vmatprep.subr.bf16.mxu0 0
    %514 = vmatpush1.bf16.msra.mxu0 0
    %515 = vmatprep.subr.bf16.mxu0 0
    %516 = vmatpush1.bf16.msra.mxu0 0
    %517 = vmatprep.subr.bf16.mxu0 0
    %518 = vmatpush1.bf16.msra.mxu0 0
    %519 = vmatprep.subr.bf16.mxu0 0
    %520 = vmatpush1.bf16.msra.mxu0 0
    %521 = vmatprep.subr.bf16.mxu0 0
    %522 = vmatpush1.bf16.msra.mxu0 0
    %523 = vmatprep.subr.bf16.mxu0 0
    %524 = vmatpush1.bf16.msra.mxu0 0
    %525 = vmatprep.subr.bf16.mxu0 0
    %526 = vmatpush1.bf16.msra.mxu0 0
    %527 = vmatprep.mubr.bf16.mxu0 0
    %528 = vmatmul.mubr.bf16.gmra.mrb[0].mxu0 %v287
    %v529 = vpop.f32.mrb[0].mxu0
    %v530 = vadd.f32 %v493, %v529
    %v531 = vpop.f32.mrb[0].mxu0
    %v532 = vpop.f32.mrb[0].mxu0
    %v533 = vadd.f32 %v493, %v532
    %v534 = vpop.f32.mrb[0].mxu0
    %535 = vmatprep.mubr.bf16.mxu0 0
    %536 = vmatmul.mubr.bf16.gmra.mrb[0].mxu0 %v288
    %v537 = vpop.f32.mrb[0].mxu0
    %v538 = vadd.f32 %v493, %v537
    %v539 = vpop.f32.mrb[0].mxu0
    %v540 = vpop.f32.mrb[0].mxu0
    %v541 = vadd.f32 %v493, %v540
    %v542 = vpop.f32.mrb[0].mxu0
    %543 = vmatprep.mubr.bf16.mxu0 0
    %544 = vmatmul.mubr.bf16.gmra.mrb[0].mxu0 %v289
    %v545 = vpop.f32.mrb[0].mxu0
    %v546 = vadd.f32 %v493, %v545
    %v547 = vpop.f32.mrb[0].mxu0
    %v548 = vpop.f32.mrb[0].mxu0
    %v549 = vadd.f32 %v493, %v548
    %v550 = vpop.f32.mrb[0].mxu0
    %551 = vmatprep.mubr.bf16.mxu0 0
    %552 = vmatmul.mubr.bf16.gmra.mrb[0].mxu0 %v290
    %v553 = vpop.f32.mrb[0].mxu0
    %v554 = vadd.f32 %v493, %v553
    %v555 = vpop.f32.mrb[0].mxu0
    %v556 = vpop.f32.mrb[0].mxu0
    %v557 = vadd.f32 %v493, %v556
    %v558 = vpop.f32.mrb[0].mxu0
    %559 = vmatprep.mubr.bf16.mxu0 0
    %560 = vmatmul.mubr.bf16.gmra.mrb[0].mxu0 %v291
    %v561 = vpop.f32.mrb[0].mxu0
    %v562 = vadd.f32 %v493, %v561
    %v563 = vpop.f32.mrb[0].mxu0
    %v564 = vpop.f32.mrb[0].mxu0
    %v565 = vadd.f32 %v493, %v564
    %v566 = vpop.f32.mrb[0].mxu0
    %567 = vmatprep.mubr.bf16.mxu0 0
    %568 = vmatmul.mubr.bf16.gmra.mrb[0].mxu0 %v292
    %v569 = vpop.f32.mrb[0].mxu0
    %v570 = vadd.f32 %v493, %v569
    %v571 = vpop.f32.mrb[0].mxu0
    %v572 = vpop.f32.mrb[0].mxu0
    %v573 = vadd.f32 %v493, %v572
    %v574 = vpop.f32.mrb[0].mxu0
    %575 = vmatprep.mubr.bf16.mxu0 0
    %576 = vmatmul.mubr.bf16.gmra.mrb[0].mxu0 %v293
    %v577 = vpop.f32.mrb[0].mxu0
    %v578 = vadd.f32 %v493, %v577
    %v579 = vpop.f32.mrb[0].mxu0
    %v580 = vpop.f32.mrb[0].mxu0
    %v581 = vadd.f32 %v493, %v580
    %v582 = vpop.f32.mrb[0].mxu0
    %583 = vmatprep.mubr.bf16.mxu0 0
    %584 = vmatmul.mubr.bf16.gmra.mrb[0].mxu0 %v294
    %v585 = vpop.f32.mrb[0].mxu0
    %v586 = vadd.f32 %v493, %v585
    %v587 = vpop.f32.mrb[0].mxu0
    %v588 = vpop.f32.mrb[0].mxu0
    %v589 = vadd.f32 %v493, %v588
    %v590 = vpop.f32.mrb[0].mxu0
    %591 = vdwg.mxu0
    %v592 = vmax.f32 %v530, 0.0
    %v593 = vmax.f32 %v533, 0.0
    %v594 = vmax.f32 %v538, 0.0
    %v595 = vmax.f32 %v541, 0.0
    %v596 = vmax.f32 %v546, 0.0
    %v597 = vmax.f32 %v549, 0.0
    %v598 = vmax.f32 %v554, 0.0
    %v599 = vmax.f32 %v557, 0.0
    %v600 = vmax.f32 %v562, 0.0
    %v601 = vmax.f32 %v565, 0.0
    %v602 = vmax.f32 %v570, 0.0
    %v603 = vmax.f32 %v573, 0.0
    %v604 = vmax.f32 %v578, 0.0
    %v605 = vmax.f32 %v581, 0.0
    %v606 = vmax.f32 %v586, 0.0
    %v607 = vmax.f32 %v589, 0.0
    %s608 = scalar_lea.vmem [#allocation7], 64
    %v609 = vld [vmem:[%s608] sm:$0xf]
    %v610 = vld [vmem:[%s608 + $0x4] sm:$0xf]
    %v611 = vld [vmem:[%s608 + $0x8] sm:$0xf]
    %v612 = vld [vmem:[%s608 + $0xc] sm:$0xf]
    %v613 = vld [vmem:[%s608 + $0x10] sm:$0xf]
    %v614 = vld [vmem:[%s608 + $0x14] sm:$0xf]
    %v615 = vld [vmem:[%s608 + $0x18] sm:$0xf]
    %v616 = vld [vmem:[%s608 + $0x1c] sm:$0xf]
    %v617 = vld [vmem:[%s608 + $0x20] sm:$0xf]
    %v618 = vld [vmem:[%s608 + $0x24] sm:$0xf]
    %v619 = vld [vmem:[%s608 + $0x28] sm:$0xf]
    %v620 = vld [vmem:[%s608 + $0x2c] sm:$0xf]
    %v621 = vld [vmem:[%s608 + $0x30] sm:$0xf]
    %v622 = vld [vmem:[%s608 + $0x34] sm:$0xf]
    %v623 = vld [vmem:[%s608 + $0x38] sm:$0xf]
    %v624 = vld [vmem:[%s608 + $0x3c] sm:$0xf]
    %s625 = scalar_lea.vmem %s6, 1
    %v626 = vld [vmem:[%s625] sm:$0x1]
    %v627 = vpack.c.bf16 %v593, %v592
    %v628 = vpack.c.bf16 %v595, %v594
    %v629 = vpack.c.bf16 %v597, %v596
    %v630 = vpack.c.bf16 %v599, %v598
    %v631 = vpack.c.bf16 %v601, %v600
    %v632 = vpack.c.bf16 %v603, %v602
    %v633 = vpack.c.bf16 %v605, %v604
    %v634 = vpack.c.bf16 %v607, %v606
    %v651 = vunpack.c.l.b16 %v609
    %v652 = vunpack.c.l.b16 %v610
    %v653 = vunpack.c.l.b16 %v611
    %v654 = vunpack.c.l.b16 %v612
    %v655 = vunpack.c.l.b16 %v613
    %v656 = vunpack.c.l.b16 %v614
    %v657 = vunpack.c.l.b16 %v615
    %v658 = vunpack.c.l.b16 %v616
    %v659 = vunpack.c.l.b16 %v617
    %v660 = vunpack.c.l.b16 %v618
    %v661 = vunpack.c.l.b16 %v619
    %v662 = vunpack.c.l.b16 %v620
    %v663 = vunpack.c.l.b16 %v621
    %v664 = vunpack.c.l.b16 %v622
    %v665 = vunpack.c.l.b16 %v623
    %v666 = vunpack.c.l.b16 %v624
    %v667 = vpack.c.b16 %v652, %v651
    %v668 = vpack.c.b16 %v654, %v653
    %v669 = vpack.c.b16 %v656, %v655
    %v670 = vpack.c.b16 %v658, %v657
    %v671 = vpack.c.b16 %v660, %v659
    %v672 = vpack.c.b16 %v662, %v661
    %v673 = vpack.c.b16 %v664, %v663
    %v674 = vpack.c.b16 %v666, %v665
    %683 = vmatprep.subr.bf16.mxu0 0
    %684 = vmatpush1.bf16.msra.mxu0 %v667
    %685 = vmatprep.subr.bf16.mxu0 0
    %686 = vmatpush1.bf16.msra.mxu0 %v668
    %687 = vmatprep.subr.bf16.mxu0 0
    %688 = vmatpush1.bf16.msra.mxu0 %v669
    %689 = vmatprep.subr.bf16.mxu0 0
    %690 = vmatpush1.bf16.msra.mxu0 %v670
    %691 = vmatprep.subr.bf16.mxu0 0
    %692 = vmatpush1.bf16.msra.mxu0 %v671
    %693 = vmatprep.subr.bf16.mxu0 0
    %694 = vmatpush1.bf16.msra.mxu0 %v672
    %695 = vmatprep.subr.bf16.mxu0 0
    %696 = vmatpush1.bf16.msra.mxu0 %v673
    %697 = vmatprep.subr.bf16.mxu0 0
    %698 = vmatpush1.bf16.msra.mxu0 %v674
    %699 = vmatprep.subr.bf16.mxu0 0
    %700 = vmatpush1.bf16.msra.mxu0 0
    %701 = vmatprep.subr.bf16.mxu0 0
    %702 = vmatpush1.bf16.msra.mxu0 0
    %703 = vmatprep.subr.bf16.mxu0 0
    %704 = vmatpush1.bf16.msra.mxu0 0
    %705 = vmatprep.subr.bf16.mxu0 0
    %706 = vmatpush1.bf16.msra.mxu0 0
    %707 = vmatprep.subr.bf16.mxu0 0
    %708 = vmatpush1.bf16.msra.mxu0 0
    %709 = vmatprep.subr.bf16.mxu0 0
    %710 = vmatpush1.bf16.msra.mxu0 0
    %711 = vmatprep.subr.bf16.mxu0 0
    %712 = vmatpush1.bf16.msra.mxu0 0
    %713 = vmatprep.subr.bf16.mxu0 0
    %714 = vmatpush1.bf16.msra.mxu0 0
    %715 = vmatprep.mubr.bf16.mxu0 0
    %716 = vmatmul.mubr.bf16.gmra.mrb[0].mxu0 %v627
    %v717 = vpop.f32.mrb[0].mxu0
    %v718 = vadd.f32 0.0, %v717
    %v719 = vpop.f32.mrb[0].mxu0
    %v720 = vpop.f32.mrb[0].mxu0
    %v721 = vadd.f32 0.0, %v720
    %v722 = vpop.f32.mrb[0].mxu0
    %723 = vmatprep.mubr.bf16.mxu0 0
    %724 = vmatmul.mubr.bf16.gmra.mrb[0].mxu0 %v628
    %v725 = vpop.f32.mrb[0].mxu0
    %v726 = vadd.f32 0.0, %v725
    %v727 = vpop.f32.mrb[0].mxu0
    %v728 = vpop.f32.mrb[0].mxu0
    %v729 = vadd.f32 0.0, %v728
    %v730 = vpop.f32.mrb[0].mxu0
    %731 = vmatprep.mubr.bf16.mxu0 0
    %732 = vmatmul.mubr.bf16.gmra.mrb[0].mxu0 %v629
    %v733 = vpop.f32.mrb[0].mxu0
    %v734 = vadd.f32 0.0, %v733
    %v735 = vpop.f32.mrb[0].mxu0
    %v736 = vpop.f32.mrb[0].mxu0
    %v737 = vadd.f32 0.0, %v736
    %v738 = vpop.f32.mrb[0].mxu0
    %739 = vmatprep.mubr.bf16.mxu0 0
    %740 = vmatmul.mubr.bf16.gmra.mrb[0].mxu0 %v630
    %v741 = vpop.f32.mrb[0].mxu0
    %v742 = vadd.f32 0.0, %v741
    %v743 = vpop.f32.mrb[0].mxu0
    %v744 = vpop.f32.mrb[0].mxu0
    %v745 = vadd.f32 0.0, %v744
    %v746 = vpop.f32.mrb[0].mxu0
    %747 = vmatprep.mubr.bf16.mxu0 0
    %748 = vmatmul.mubr.bf16.gmra.mrb[0].mxu0 %v631
    %v749 = vpop.f32.mrb[0].mxu0
    %v750 = vadd.f32 0.0, %v749
    %v751 = vpop.f32.mrb[0].mxu0
    %v752 = vpop.f32.mrb[0].mxu0
    %v753 = vadd.f32 0.0, %v752
    %v754 = vpop.f32.mrb[0].mxu0
    %755 = vmatprep.mubr.bf16.mxu0 0
    %756 = vmatmul.mubr.bf16.gmra.mrb[0].mxu0 %v632
    %v757 = vpop.f32.mrb[0].mxu0
    %v758 = vadd.f32 0.0, %v757
    %v759 = vpop.f32.mrb[0].mxu0
    %v760 = vpop.f32.mrb[0].mxu0
    %v761 = vadd.f32 0.0, %v760
    %v762 = vpop.f32.mrb[0].mxu0
    %763 = vmatprep.mubr.bf16.mxu0 0
    %764 = vmatmul.mubr.bf16.gmra.mrb[0].mxu0 %v633
    %v765 = vpop.f32.mrb[0].mxu0
    %v766 = vadd.f32 0.0, %v765
    %v767 = vpop.f32.mrb[0].mxu0
    %v768 = vpop.f32.mrb[0].mxu0
    %v769 = vadd.f32 0.0, %v768
    %v770 = vpop.f32.mrb[0].mxu0
    %771 = vmatprep.mubr.bf16.mxu0 0
    %772 = vmatmul.mubr.bf16.gmra.mrb[0].mxu0 %v634
    %v773 = vpop.f32.mrb[0].mxu0
    %v774 = vadd.f32 0.0, %v773
    %v775 = vpop.f32.mrb[0].mxu0
    %v776 = vpop.f32.mrb[0].mxu0
    %v777 = vadd.f32 0.0, %v776
    %v778 = vpop.f32.mrb[0].mxu0
    %779 = vdwg.mxu0
    %v780 = vpack.c.bf16 %v721, %v718
    %v781 = vpack.c.bf16 %v729, %v726
    %v782 = vpack.c.bf16 %v737, %v734
    %v783 = vpack.c.bf16 %v745, %v742
    %v784 = vpack.c.bf16 %v753, %v750
    %v785 = vpack.c.bf16 %v761, %v758
    %v786 = vpack.c.bf16 %v769, %v766
    %v787 = vpack.c.bf16 %v777, %v774
    %v789 = vlaneseq
    %v790 = vshrl.u32 %v789, 7
    %v791 = vsub.s32 0, %v790
    %v792 = vrot.slane %v626, %v791
    %794 = vmatprep.subr.bf16.mxu0 0
    %795 = vmatpush1.bf16.msra.mxu0 %v780
    %796 = vmatprep.subr.bf16.mxu0 0
    %797 = vmatpush1.bf16.msra.mxu0 %v781
    %798 = vmatprep.subr.bf16.mxu0 0
    %799 = vmatpush1.bf16.msra.mxu0 %v782
    %800 = vmatprep.subr.bf16.mxu0 0
    %801 = vmatpush1.bf16.msra.mxu0 %v783
    %802 = vmatprep.subr.bf16.mxu0 0
    %803 = vmatpush1.bf16.msra.mxu0 %v784
    %804 = vmatprep.subr.bf16.mxu0 0
    %805 = vmatpush1.bf16.msra.mxu0 %v785
    %806 = vmatprep.subr.bf16.mxu0 0
    %807 = vmatpush1.bf16.msra.mxu0 %v786
    %808 = vmatprep.subr.bf16.mxu0 0
    %809 = vmatpush1.bf16.msra.mxu0 %v787
    %810 = vmatprep.subr.bf16.mxu0 0
    %811 = vmatpush1.bf16.msra.mxu0 0
    %812 = vmatprep.subr.bf16.mxu0 0
    %813 = vmatpush1.bf16.msra.mxu0 0
    %814 = vmatprep.subr.bf16.mxu0 0
    %815 = vmatpush1.bf16.msra.mxu0 0
    %816 = vmatprep.subr.bf16.mxu0 0
    %817 = vmatpush1.bf16.msra.mxu0 0
    %818 = vmatprep.subr.bf16.mxu0 0
    %819 = vmatpush1.bf16.msra.mxu0 0
    %820 = vmatprep.subr.bf16.mxu0 0
    %821 = vmatpush1.bf16.msra.mxu0 0
    %822 = vmatprep.subr.bf16.mxu0 0
    %823 = vmatpush1.bf16.msra.mxu0 0
    %824 = vmatprep.subr.bf16.mxu0 0
    %825 = vmatpush1.bf16.msra.mxu0 0
    %826 = vmatprep.mubr.bf16.mxu0 0
    %827 = vmatmul.mubr.bf16.gmra.mrb[0].mxu0 %v287
    %v828 = vpop.f32.mrb[0].mxu0
    %v829 = vadd.f32 %v792, %v828
    %v830 = vpop.f32.mrb[0].mxu0
    %v831 = vpop.f32.mrb[0].mxu0
    %v832 = vadd.f32 %v792, %v831
    %v833 = vpop.f32.mrb[0].mxu0
    %834 = vmatprep.mubr.bf16.mxu0 0
    %835 = vmatmul.mubr.bf16.gmra.mrb[0].mxu0 %v288
    %v836 = vpop.f32.mrb[0].mxu0
    %v837 = vadd.f32 %v792, %v836
    %v838 = vpop.f32.mrb[0].mxu0
    %v839 = vpop.f32.mrb[0].mxu0
    %v840 = vadd.f32 %v792, %v839
    %v841 = vpop.f32.mrb[0].mxu0
    %842 = vmatprep.mubr.bf16.mxu0 0
    %843 = vmatmul.mubr.bf16.gmra.mrb[0].mxu0 %v289
    %v844 = vpop.f32.mrb[0].mxu0
    %v845 = vadd.f32 %v792, %v844
    %v846 = vpop.f32.mrb[0].mxu0
    %v847 = vpop.f32.mrb[0].mxu0
    %v848 = vadd.f32 %v792, %v847
    %v849 = vpop.f32.mrb[0].mxu0
    %850 = vmatprep.mubr.bf16.mxu0 0
    %851 = vmatmul.mubr.bf16.gmra.mrb[0].mxu0 %v290
    %v852 = vpop.f32.mrb[0].mxu0
    %v853 = vadd.f32 %v792, %v852
    %v854 = vpop.f32.mrb[0].mxu0
    %v855 = vpop.f32.mrb[0].mxu0
    %v856 = vadd.f32 %v792, %v855
    %v857 = vpop.f32.mrb[0].mxu0
    %858 = vmatprep.mubr.bf16.mxu0 0
    %859 = vmatmul.mubr.bf16.gmra.mrb[0].mxu0 %v291
    %v860 = vpop.f32.mrb[0].mxu0
    %v861 = vadd.f32 %v792, %v860
    %v862 = vpop.f32.mrb[0].mxu0
    %v863 = vpop.f32.mrb[0].mxu0
    %v864 = vadd.f32 %v792, %v863
    %v865 = vpop.f32.mrb[0].mxu0
    %866 = vmatprep.mubr.bf16.mxu0 0
    %867 = vmatmul.mubr.bf16.gmra.mrb[0].mxu0 %v292
    %v868 = vpop.f32.mrb[0].mxu0
    %v869 = vadd.f32 %v792, %v868
    %v870 = vpop.f32.mrb[0].mxu0
    %v871 = vpop.f32.mrb[0].mxu0
    %v872 = vadd.f32 %v792, %v871
    %v873 = vpop.f32.mrb[0].mxu0
    %874 = vmatprep.mubr.bf16.mxu0 0
    %875 = vmatmul.mubr.bf16.gmra.mrb[0].mxu0 %v293
    %v876 = vpop.f32.mrb[0].mxu0
    %v877 = vadd.f32 %v792, %v876
    %v878 = vpop.f32.mrb[0].mxu0
    %v879 = vpop.f32.mrb[0].mxu0
    %v880 = vadd.f32 %v792, %v879
    %v881 = vpop.f32.mrb[0].mxu0
    %882 = vmatprep.mubr.bf16.mxu0 0
    %883 = vmatmul.mubr.bf16.gmra.mrb[0].mxu0 %v294
    %v884 = vpop.f32.mrb[0].mxu0
    %v885 = vadd.f32 %v792, %v884
    %v886 = vpop.f32.mrb[0].mxu0
    %v887 = vpop.f32.mrb[0].mxu0
    %v888 = vadd.f32 %v792, %v887
    %v889 = vpop.f32.mrb[0].mxu0
    %890 = vdwg.mxu0
    %v891 = vld [vmem:[%s3] sm:$0xff]
    %v892 = vld [vmem:[%s4] sm:$0xff]
    %vm893 = vcmp.ge.s32.totalorder %v891, 0
    %vm894 = vcmp.lt.s32.totalorder %v891, 16
    %vm895 = vmand %vm893, %vm894
    %vm896 = vcmp.ge.s32.totalorder %v892, 0
    %vm897 = vcmp.lt.s32.totalorder %v892, 16
    %vm898 = vmand %vm896, %vm897
    %899 = vset.pattern.permute.xlu0 0
    %900 = vperm.xlu0 %899, %v891
    %v901 = vpop.permute.xlu0 %900
    %vm902 = vcmp.eq.s32.totalorder %v222, %v901
    %v903 = vsel %vm895, 1, 0
    %904 = vset.pattern.permute.xlu0 0
    %905 = vperm.xlu0 %904, %v903
    %v906 = vpop.permute.xlu0 %905
    %vm907 = vcmp.eq.s32.totalorder %v906, 1
    %vm908 = vmand %vm902, %vm907
    %909 = vset.pattern.permute.xlu0 0
    %910 = vperm.xlu0 %909, %v892
    %v911 = vpop.permute.xlu0 %910
    %vm912 = vcmp.eq.s32.totalorder %v222, %v911
    %v913 = vsel %vm898, 1, 0
    %914 = vset.pattern.permute.xlu0 0
    %915 = vperm.xlu0 %914, %v913
    %v916 = vpop.permute.xlu0 %915
    %vm917 = vcmp.eq.s32.totalorder %v916, 1
    %vm918 = vmand %vm912, %vm917
    %v919 = vsel %vm918, 1, 0
    %v920 = vcvt.s32.f32 %v919
    %v921 = vsel %vm908, 1, 0
    %v922 = vcvt.s32.f32 %v921
    %v923 = vsub.f32 %v920, %v922
    %v924 = vpack.c.bf16 %v923, %v923
    %v925 = vpack.c.bf16 %v832, %v829
    %v926 = vpack.c.bf16 %v840, %v837
    %v927 = vpack.c.bf16 %v848, %v845
    %v928 = vpack.c.bf16 %v856, %v853
    %v929 = vpack.c.bf16 %v864, %v861
    %v930 = vpack.c.bf16 %v872, %v869
    %v931 = vpack.c.bf16 %v880, %v877
    %v932 = vpack.c.bf16 %v888, %v885
    %933 = vmatprep.subr.bf16.mxu0 0
    %934 = vmatpush1.bf16.msra.mxu0 %v925
    %935 = vmatprep.subr.bf16.mxu0 0
    %936 = vmatpush1.bf16.msra.mxu0 %v926
    %937 = vmatprep.subr.bf16.mxu0 0
    %938 = vmatpush1.bf16.msra.mxu0 %v927
    %939 = vmatprep.subr.bf16.mxu0 0
    %940 = vmatpush1.bf16.msra.mxu0 %v928
    %941 = vmatprep.subr.bf16.mxu0 0
    %942 = vmatpush1.bf16.msra.mxu0 %v929
    %943 = vmatprep.subr.bf16.mxu0 0
    %944 = vmatpush1.bf16.msra.mxu0 %v930
    %945 = vmatprep.subr.bf16.mxu0 0
    %946 = vmatpush1.bf16.msra.mxu0 %v931
    %947 = vmatprep.subr.bf16.mxu0 0
    %948 = vmatpush1.bf16.msra.mxu0 %v932
    %949 = vmatprep.subr.bf16.mxu0 0
    %950 = vmatpush1.bf16.msra.mxu0 0
    %951 = vmatprep.subr.bf16.mxu0 0
    %952 = vmatpush1.bf16.msra.mxu0 0
    %953 = vmatprep.subr.bf16.mxu0 0
    %954 = vmatpush1.bf16.msra.mxu0 0
    %955 = vmatprep.subr.bf16.mxu0 0
    %956 = vmatpush1.bf16.msra.mxu0 0
    %957 = vmatprep.subr.bf16.mxu0 0
    %958 = vmatpush1.bf16.msra.mxu0 0
    %959 = vmatprep.subr.bf16.mxu0 0
    %960 = vmatpush1.bf16.msra.mxu0 0
    %961 = vmatprep.subr.bf16.mxu0 0
    %962 = vmatpush1.bf16.msra.mxu0 0
    %963 = vmatprep.subr.bf16.mxu0 0
    %964 = vmatpush1.bf16.msra.mxu0 0
    %965 = vmatprep.mubr.bf16.mxu0 0
    %966 = vmatmul.mubr.bf16.gmra.mrb[0].mxu0 %v924
    %v967 = vpop.f32.mrb[0].mxu0
    %v968 = vadd.f32 0.0, %v967
    %v969 = vpop.f32.mrb[0].mxu0
    %v970 = vpop.f32.mrb[0].mxu0
    %v971 = vpop.f32.mrb[0].mxu0
    %972 = vdwg.mxu0
    %v973 = vld [vmem:[%s2] sm:$0xff]
    %v974 = vmul.f32 %v973, %v968
    %975 = vadd.xlane.f32.xlu0 %v974
    %v976 = vpop.xlane.xlu0 %975
    %v977 = vmax.f32 %v976, 0.0
    %v978 = vand.u32 2147483647, %v976
    %v979 = vsub.f32 0.0, %v978
    %v980 = vmul.f32 %v979, 1.442695
    %v981 = vpow.pop %v980
    %v982 = vadd.f32 %v981, 1.0
    %v983 = vlog2.pop %v982
    %v984 = vmul.f32 %v983, 0.6931472
    %v985 = vmul.f32 -0.5, %v981
    %v986 = vadd.f32 %v985, 1.0
    %v987 = vmul.f32 %v986, %v981
    %v988 = vand.u32 2147483647, %v981
    %vm989 = vcmp.lt.f32.partialorder %v988, 0.0004427343
    %v990 = vsel %vm989, %v987, %v984
    %v991 = vadd.f32 %v977, %v990
    %vm992 = vcmp.lt.s32.totalorder %v205, 8
    %v993 = vsel %vm992, 1, 0
    %v994 = vcvt.s32.f32 %v993
    %v995 = vmul.f32 %v991, %v994
    %vm996 = vcmask 7168
    %v997 = vsel %vm996, %v995, 0.0
    %998 = vadd.xlane.f32.xlu0 %v997
    %v999 = vpop.xlane.xlu0 %998
    %v1000 = vrot.slane %v999, 4
    %v1001 = vadd.f32 %v999, %v1000
    %v1002 = vrot.slane %v1001, 2
    %v1003 = vadd.f32 %v1001, %v1002
    %v1004 = vrot.slane %v1003, 1
    %v1005 = vadd.f32 %v1003, %v1004
    %s1006 = vtos %v1005
    %s1007 = smul.f32 %s1006, 0.125
    %s1008 = scalar_lea.smem [#allocation8], 0
    %1009 = sst [smem:[%s1008]] %s1007
    // Predicated region
    $region42: #{lmgnn_forward_padded.1} parent=1 // pred_check
      _
    $region43: #{lmgnn_forward_padded.1} parent=1 // pred_check_branch
      %1011 = sbr.rel (0) target = $region45
    $region44: #{lmgnn_forward_padded.1} parent=1 // pred_region
      %s1013 = ssub.s32 16, 16
      %1014 = vsyncadd [#allocation4], %s1013
      %1017 = dma.smem_to_hbm [#allocation8], 16, %s7, [#allocation4]
    $region45: #{lmgnn_forward_padded.1} parent=1 // pred_fallthru
      _
    // Predicated region
    $region46: #{lmgnn_forward_padded.1} parent=1 // pred_check
      _
    $region47: #{lmgnn_forward_padded.1} parent=1 // pred_check_branch
      %1019 = sbr.rel (0) target = $region49
    $region48: #{lmgnn_forward_padded.1} parent=1 // pred_region
      %1020 = dma.done [#allocation4], 16
    $region49: #{lmgnn_forward_padded.1} parent=1 // pred_fallthru
      _
    %1021 = sfence
    %1022 = vsyncpa [#allocation3], 1
    %1023 = vsyncpa [#allocation6], 1
    %1024 = vsyncpa [#allocation4], 1

</llo_original>
